<compile_context>
chip_gen: v7x
topology: tpu7x:2x2x1
jax: 0.10.0
libtpu: 0.0.40
codegen_flags: <defaults>
</compile_context>

<pallas_src>
import functools

import numpy as np
import jax
import jax.numpy as jnp
from jax import lax
from jax.experimental import pallas as pl
from jax.experimental.pallas import tpu as pltpu


NODE_BLOCK = 256   # destination-node tile (v6e/v7x: 256, v5e: 128)
EDGE_TILE = 256    # edges per grid step   (v6e/v7x: 256+, v5e: 128)


def _scatter_kernel(block_id_ref, first_ref, last_ref,   # scalar prefetch (SMEM)
                    dst_ref, inv_ref, src_ref,           # tiled VMEM inputs
                    out_ref,                             # (node_block, D) output block
                    acc_ref):                            # (node_block, D) f32 scratch
    """One edge tile: acc[n, :] += sum_e [dst_e == n] * inv_e * src[e, :]."""
    i = pl.program_id(0)

    # Zero the f32 accumulator at the first edge tile of this destination block.
    @pl.when(first_ref[i] == 1)
    def _init():
        acc_ref[...] = jnp.zeros_like(acc_ref)

    tn = acc_ref.shape[0]
    te = src_ref.shape[0]

    dst = dst_ref[0]                                  # (1, TE) int32, -1 for padding
    inv = inv_ref[0]                                  # (1, TE) f32, 0 for padding

    # Transposed, scaled one-hot built directly: node dim on sublanes, edge dim on
    # lanes.  Padding edges (dst = -1) never match -> contribute exactly zero.
    node_iota = lax.broadcasted_iota(jnp.int32, (tn, te), 0)
    oh = jnp.where(dst == node_iota, inv, jnp.float32(0.0))          # (TN, TE) f32

    src = src_ref[...].astype(jnp.float32)                           # (TE, D)

    # Scatter-add on the MXU, contraction over the edge dim (no transpose).
    acc_ref[...] += jnp.dot(oh, src, preferred_element_type=jnp.float32)

    # Single writeback (with a single cast) per destination node block.
    @pl.when(last_ref[i] == 1)
    def _finalize():
        out_ref[...] = acc_ref[...].astype(out_ref.dtype)


@functools.partial(
    jax.jit,
    static_argnames=("node_block", "edge_tile", "num_blocks", "n_dst"))
def _scatter_sum(x_src, src_gidx, dst_local, inv_e, block_id, is_first, is_last,
                 *, node_block, edge_tile, num_blocks, n_dst):
    """out[d] = sum over edges (d, s) of x_src[s] * inv, with CSR-bucketed edges."""
    d = x_src.shape[1]
    num_tiles = block_id.shape[0]

    # Row gather of source features.
    # TODO(synk): the dynamic row-gather stays in XLA (jnp.take); Mosaic has no
    # general dynamic row-gather primitive, so only the scale + scatter-add run
    # inside the Pallas kernel.
    gathered = jnp.take(x_src, src_gidx, axis=0)          # (num_tiles*edge_tile, D)

    dst3 = dst_local.reshape(num_tiles, 1, edge_tile)     # lane-dense edge metadata
    inv3 = inv_e.reshape(num_tiles, 1, edge_tile)

    out = pl.pallas_call(
        _scatter_kernel,
        out_shape=jax.ShapeDtypeStruct((num_blocks * node_block, d), x_src.dtype),
        grid_spec=pltpu.PrefetchScalarGridSpec(
            num_scalar_prefetch=3,                        # block_id, is_first, is_last
            grid=(num_tiles,),
            in_specs=[
                pl.BlockSpec((1, 1, edge_tile), lambda i, bid, fi, la: (i, 0, 0)),
                pl.BlockSpec((1, 1, edge_tile), lambda i, bid, fi, la: (i, 0, 0)),
                pl.BlockSpec((edge_tile, d), lambda i, bid, fi, la: (i, 0)),
            ],
            out_specs=pl.BlockSpec((node_block, d),
                                   lambda i, bid, fi, la: (bid[i], 0)),
            scratch_shapes=[pltpu.VMEM((node_block, d), jnp.float32)],
        ),
        compiler_params=pltpu.CompilerParams(
            dimension_semantics=("arbitrary",)),          # edges are a reduction axis
    )(block_id, is_first, is_last, dst3, inv3, gathered)

    return out[:n_dst]


def build_scatter_plan(dst_idx, src_idx, inv, n_dst, *,
                       node_block=NODE_BLOCK, edge_tile=EDGE_TILE):
    """__init__-equivalent host preprocessing: sort/bucket edges by destination
    node block, pad each bucket to a multiple of edge_tile (every block gets at
    least one tile so empty blocks are still written as zeros)."""
    dst_idx = np.asarray(jax.device_get(dst_idx)).astype(np.int64)
    src_idx = np.asarray(jax.device_get(src_idx)).astype(np.int64)
    inv = np.asarray(jax.device_get(inv)).astype(np.float32)

    num_blocks = max(1, (n_dst + node_block - 1) // node_block)

    blk = dst_idx // node_block
    order = np.argsort(blk, kind="stable")
    dst_s, src_s, inv_s, blk_s = dst_idx[order], src_idx[order], inv[order], blk[order]

    counts = np.bincount(blk_s, minlength=num_blocks).astype(np.int64)[:num_blocks]
    tiles_per_block = np.maximum(1, (counts + edge_tile - 1) // edge_tile)
    num_tiles = int(tiles_per_block.sum())
    padded_e = num_tiles * edge_tile

    dst_local = np.full((padded_e,), -1, dtype=np.int32)   # -1 => padding edge
    src_g = np.zeros((padded_e,), dtype=np.int32)
    inv_p = np.zeros((padded_e,), dtype=np.float32)
    block_id = np.zeros((num_tiles,), dtype=np.int32)
    is_first = np.zeros((num_tiles,), dtype=np.int32)
    is_last = np.zeros((num_tiles,), dtype=np.int32)

    starts = np.concatenate([[0], np.cumsum(counts)])
    tile_pos, out_pos = 0, 0
    for b in range(num_blocks):
        cnt = int(counts[b])
        tb = int(tiles_per_block[b])
        s = int(starts[b])
        dst_local[out_pos:out_pos + cnt] = (dst_s[s:s + cnt] - b * node_block).astype(np.int32)
        src_g[out_pos:out_pos + cnt] = src_s[s:s + cnt].astype(np.int32)
        inv_p[out_pos:out_pos + cnt] = inv_s[s:s + cnt]
        block_id[tile_pos:tile_pos + tb] = b
        is_first[tile_pos] = 1
        is_last[tile_pos + tb - 1] = 1
        tile_pos += tb
        out_pos += tb * edge_tile

    return dict(
        src_gidx=jnp.asarray(src_g),
        dst_local=jnp.asarray(dst_local),
        inv_e=jnp.asarray(inv_p),
        block_id=jnp.asarray(block_id),
        is_first=jnp.asarray(is_first),
        is_last=jnp.asarray(is_last),
        node_block=int(node_block),
        edge_tile=int(edge_tile),
        num_blocks=int(num_blocks),
        n_dst=int(n_dst),
    )


def user_spot_conv(spot_x, user_x, plan_user, plan_spot):
    """Forward pass of UserSpotConv: returns (spot_out, user_out)."""
    user_out = _scatter_sum(spot_x, **plan_user)   # spot features -> user nodes
    spot_out = _scatter_sum(user_x, **plan_spot)   # user features -> spot nodes
    return spot_out, user_out


def reference(spot_x, user_x, user_idx, spot_idx, inv_div):
    n_user = user_x.shape[0]
    m_spot = spot_x.shape[0]
    src_spot = spot_x[spot_idx] * inv_div[:, None]
    user_out = jax.ops.segment_sum(src_spot, user_idx, num_segments=n_user)
    src_user = user_x[user_idx] * inv_div[:, None]
    spot_out = jax.ops.segment_sum(src_user, spot_idx, num_segments=m_spot)
    return spot_out, user_out


if __name__ == "__main__":
    # Small synthetic graph (real module hardcodes n_user=27094, m_spot=42852).
    n_user, m_spot, d, n_edges = 64, 80, 128, 256

    key = jax.random.PRNGKey(0)
    k1, k2, k3, k4 = jax.random.split(key, 4)
    user_idx = jax.random.randint(k1, (n_edges,), 0, n_user, dtype=jnp.int32)
    spot_idx = jax.random.randint(k2, (n_edges,), 0, m_spot, dtype=jnp.int32)
    spot_x = jax.random.normal(k3, (m_spot, d), dtype=jnp.float32)
    user_x = jax.random.normal(k4, (n_user, d), dtype=jnp.float32)

    # __init__-equivalent glue: per-node degrees from the edge list, then
    # div_e = sqrt(deg_user[u_e] * deg_spot[s_e]); kernel consumes 1/div.
    user_div = jnp.zeros((n_user,), jnp.int32).at[user_idx].add(1)
    spot_div = jnp.zeros((m_spot,), jnp.int32).at[spot_idx].add(1)
    div = jnp.sqrt((user_div[user_idx] * spot_div[spot_idx]).astype(jnp.float32))
    inv_div = 1.0 / div   # every edge endpoint has degree >= 1, so div > 0

    # Static edge plans (the edge list is fixed in the module's __init__).
    plan_user = build_scatter_plan(user_idx, spot_idx, inv_div, n_user)
    plan_spot = build_scatter_plan(spot_idx, user_idx, inv_div, m_spot)

    spot_out, user_out = user_spot_conv(spot_x, user_x, plan_user, plan_spot)
    jax.block_until_ready((spot_out, user_out))

    ref_spot_out, ref_user_out = reference(spot_x, user_x, user_idx, spot_idx, inv_div)
    assert jnp.allclose(spot_out, ref_spot_out, atol=1e-4, rtol=1e-4)
    assert jnp.allclose(user_out, ref_user_out, atol=1e-4, rtol=1e-4)

    print("KERNEL_OK")
</pallas_src>

<mosaic_0001>
module attributes {stable_mosaic.version = 11 : i64} {
  func.func @_scatter_kernel(%arg0: i32, %arg1: memref<1xi32, #tpu.memory_space<smem>>, %arg2: memref<1xi32, #tpu.memory_space<smem>>, %arg3: memref<1xi32, #tpu.memory_space<smem>>, %arg4: memref<1x1x256xi32, #tpu.memory_space<vmem>>, %arg5: memref<1x1x256xf32, #tpu.memory_space<vmem>>, %arg6: memref<256x128xf32, #tpu.memory_space<vmem>>, %arg7: memref<256x128xf32, #tpu.memory_space<vmem>>, %arg8: memref<256x128xf32, #tpu.memory_space<vmem>>) attributes {dimension_semantics = [#tpu.dimension_semantics<arbitrary>], iteration_bounds = array<i64: 1>, scalar_prefetch = 3 : i64, scratch_operands = 1 : i64, tpu.core_type = #tpu.core_type<tc>, window_params = [{transform_indices = @transform_0, window_bounds = array<i64: 1, 1, 256>}, {transform_indices = @transform_1, window_bounds = array<i64: 1, 1, 256>}, {transform_indices = @transform_2, window_bounds = array<i64: 256, 128>}, {transform_indices = @transform_3, window_bounds = array<i64: 256, 128>}]} {
    %0 = arith.index_cast %arg0 : i32 to index
    %1 = memref.load %arg2[%0] : memref<1xi32, #tpu.memory_space<smem>>
    %c1_i32 = arith.constant 1 : i32
    %2 = arith.cmpi eq, %1, %c1_i32 : i32
    %3 = arith.extui %2 : i1 to i32
    %c0_i32 = arith.constant 0 : i32
    %4 = arith.cmpi ne, %3, %c0_i32 : i32
    scf.if %4 {
      %cst_14 = arith.constant 0.000000e+00 : f32
      %26 = vector.broadcast %cst_14 : f32 to vector<256x128xf32>
      %c0_15 = arith.constant 0 : index
      %c0_16 = arith.constant 0 : index
      %27 = vector.load %arg8[%c0_15, %c0_16] : memref<256x128xf32, #tpu.memory_space<vmem>>, vector<256x128xf32>
      tpu.vector_store %arg8[%c0_15, %c0_16], %26 {strides = array<i32>} : memref<256x128xf32, #tpu.memory_space<vmem>>, vector<256x128xf32>,
    } else {
    }
    %c0 = arith.constant 0 : index
    %c0_0 = arith.constant 0 : index
    %c0_1 = arith.constant 0 : index
    %5 = vector.load %arg4[%c0, %c0_0, %c0_1] : memref<1x1x256xi32, #tpu.memory_space<vmem>>, vector<1x1x256xi32>
    %6 = vector.shape_cast %5 : vector<1x1x256xi32> to vector<1x256xi32>
    %c0_2 = arith.constant 0 : index
    %c0_3 = arith.constant 0 : index
    %c0_4 = arith.constant 0 : index
    %7 = vector.load %arg5[%c0_2, %c0_3, %c0_4] : memref<1x1x256xf32, #tpu.memory_space<vmem>>, vector<1x1x256xf32>
    %8 = vector.shape_cast %7 : vector<1x1x256xf32> to vector<1x256xf32>
    %9 = tpu.iota {dimensions = array<i32: 0>} : vector<256x256xi32>
    %10 = vector.broadcast %6 : vector<1x256xi32> to vector<256x256xi32>
    %11 = arith.cmpi eq, %10, %9 : vector<256x256xi32>
    %cst = arith.constant 0.000000e+00 : f32
    %12 = vector.shape_cast %8 : vector<1x256xf32> to vector<1x256xf32>
    %13 = vector.broadcast %12 : vector<1x256xf32> to vector<256x256xf32>
    %14 = vector.broadcast %cst : f32 to vector<256x256xf32>
    %15 = arith.select %11, %13, %14 : vector<256x256xi1>, vector<256x256xf32>
    %c0_5 = arith.constant 0 : index
    %c0_6 = arith.constant 0 : index
    %16 = vector.load %arg6[%c0_5, %c0_6] : memref<256x128xf32, #tpu.memory_space<vmem>>, vector<256x128xf32>
    %c0_7 = arith.constant 0 : index
    %c0_8 = arith.constant 0 : index
    %17 = vector.load %arg8[%c0_7, %c0_8] : memref<256x128xf32, #tpu.memory_space<vmem>>, vector<256x128xf32>
    %cst_9 = arith.constant dense<0.000000e+00> : vector<256x128xf32>
    %18 = tpu.matmul %15, %16, %cst_9 {dimension_numbers = #tpu.dot_dimension_numbers<[1], [0], [0], [1], [0, 0, 1, 1], [], []>} : vector<256x256xf32>, vector<256x128xf32>, vector<256x128xf32> -> vector<256x128xf32>
    %19 = arith.addf %17, %18 : vector<256x128xf32>
    %c0_10 = arith.constant 0 : index
    %c0_11 = arith.constant 0 : index
    %20 = vector.load %arg8[%c0_10, %c0_11] : memref<256x128xf32, #tpu.memory_space<vmem>>, vector<256x128xf32>
    tpu.vector_store %arg8[%c0_10, %c0_11], %19 {strides = array<i32>} : memref<256x128xf32, #tpu.memory_space<vmem>>, vector<256x128xf32>,
    %21 = arith.index_cast %arg0 : i32 to index
    %22 = memref.load %arg3[%21] : memref<1xi32, #tpu.memory_space<smem>>
    %c1_i32_12 = arith.constant 1 : i32
    %23 = arith.cmpi eq, %22, %c1_i32_12 : i32
    %24 = arith.extui %23 : i1 to i32
    %c0_i32_13 = arith.constant 0 : i32
    %25 = arith.cmpi ne, %24, %c0_i32_13 : i32
    scf.if %25 {
      %c0_14 = arith.constant 0 : index
      %c0_15 = arith.constant 0 : index
      %26 = vector.load %arg8[%c0_14, %c0_15] : memref<256x128xf32, #tpu.memory_space<vmem>>, vector<256x128xf32>
      %c0_16 = arith.constant 0 : index
      %c0_17 = arith.constant 0 : index
      %27 = vector.load %arg7[%c0_16, %c0_17] : memref<256x128xf32, #tpu.memory_space<vmem>>, vector<256x128xf32>
      tpu.vector_store %arg7[%c0_16, %c0_17], %26 {strides = array<i32>} : memref<256x128xf32, #tpu.memory_space<vmem>>, vector<256x128xf32>,
    } else {
    }
    return
  }
  func.func @transform_0(%arg0: i32, %arg1: memref<1xi32, #tpu.memory_space<smem>>, %arg2: memref<1xi32, #tpu.memory_space<smem>>, %arg3: memref<1xi32, #tpu.memory_space<smem>>) -> (i32, i32, i32) {
    %c0_i32 = arith.constant 0 : i32
    %c0_i32_0 = arith.constant 0 : i32
    %c0_i32_1 = arith.constant 0 : i32
    return %arg0, %c0_i32, %c0_i32_0 : i32, i32, i32
  }
  func.func @transform_1(%arg0: i32, %arg1: memref<1xi32, #tpu.memory_space<smem>>, %arg2: memref<1xi32, #tpu.memory_space<smem>>, %arg3: memref<1xi32, #tpu.memory_space<smem>>) -> (i32, i32, i32) {
    %c0_i32 = arith.constant 0 : i32
    %c0_i32_0 = arith.constant 0 : i32
    %c0_i32_1 = arith.constant 0 : i32
    return %arg0, %c0_i32, %c0_i32_0 : i32, i32, i32
  }
  func.func @transform_2(%arg0: i32, %arg1: memref<1xi32, #tpu.memory_space<smem>>, %arg2: memref<1xi32, #tpu.memory_space<smem>>, %arg3: memref<1xi32, #tpu.memory_space<smem>>) -> (i32, i32) {
    %c0_i32 = arith.constant 0 : i32
    %c0_i32_0 = arith.constant 0 : i32
    return %arg0, %c0_i32 : i32, i32
  }
  func.func @transform_3(%arg0: i32, %arg1: memref<1xi32, #tpu.memory_space<smem>>, %arg2: memref<1xi32, #tpu.memory_space<smem>>, %arg3: memref<1xi32, #tpu.memory_space<smem>>) -> (i32, i32) {
    %0 = arith.index_cast %arg0 : i32 to index
    %1 = memref.load %arg1[%0] : memref<1xi32, #tpu.memory_space<smem>>
    %c0_i32 = arith.constant 0 : i32
    %c0_i32_0 = arith.constant 0 : i32
    return %1, %c0_i32 : i32, i32
  }
}

</mosaic_0001>

<llo_original>
// kernel: _scatter_sum.1
$region0: #{_scatter_sum.1}
  #allocation0 [shape = 'u32[]', space=smem, size = 0x4, offset = 0x4, fixed_abs, tag = 'smem constant byte address 0x4 - core index']
  #allocation1 [shape = 'u32[144,128]{1,0:T(1,128)}', space=vmem, size = 0x12000, scoped, tag = 'internal scratch']
  #allocation2 [shape = 'f32[256,128]{1,0:T(8,128)}', space=vmem, size = 0x20000, scoped, tag = 'scratch operand']
  #allocation3 [shape = 's32[1]{0}', space=sflag, size = 0x4, scoped, tag = 'scoped memory for _scatter_sum.1']
  #allocation4 [shape = 's32[1]{0:T(128)S(6)}', space=smem, size = 0x200, scoped, tag = 'prefetched SMEM operand 0']
  #allocation5 [shape = 's32[1]{0:T(128)S(6)}', space=smem, size = 0x200, scoped, tag = 'prefetched SMEM operand 1']
  #allocation6 [shape = 's32[1]{0:T(128)S(6)}', space=smem, size = 0x200, scoped, tag = 'prefetched SMEM operand 2']
  %s0 = inlined_call_operand.<no memory space> [shape: s32[1], index: 0, kind: input, shape index: {}]
  %s1 = inlined_call_operand.<no memory space> [shape: s32[1], index: 1, kind: input, shape index: {}]
  %s2 = inlined_call_operand.<no memory space> [shape: s32[1], index: 2, kind: input, shape index: {}]
  %s3 = inlined_call_operand.vmem [shape: s32[1,1,256], index: 3, kind: input, shape index: {}]
  %s4 = inlined_call_operand.vmem [shape: f32[1,1,256], index: 4, kind: input, shape index: {}]
  %s5 = inlined_call_operand.vmem [shape: f32[256,128], index: 5, kind: input, shape index: {}]
  %s6 = inlined_call_operand.vmem [shape: f32[256,128], index: 6, kind: output, shape index: {}]
  %s7 = sld [smem:[#allocation0]]
  $region30: #{_scatter_sum.1} parent=0
    _
  %s9 = ssub.s32 1, %s7
  %s10 = scalar_select 0, %s9, %s7
  %11 = sst [smem:[#allocation4]] %s0
  %12 = sst [smem:[#allocation5]] %s1
  %13 = sst [smem:[#allocation6]] %s2
  // Predicated region
  $region2: #{_scatter_sum.1} parent=0 // pred_check
    _
  $region3: #{_scatter_sum.1} parent=0 // pred_check_branch
    %15 = sbr.rel (0) target = $region5
  $region4: #{_scatter_sum.1} parent=0 // pred_region
    _
  $region5: #{_scatter_sum.1} parent=0 // pred_fallthru
    _
  // Predicated region
  $region6: #{_scatter_sum.1} parent=0 // pred_check
    _
  $region7: #{_scatter_sum.1} parent=0 // pred_check_branch
    %17 = sbr.rel (0) target = $region9
  $region8: #{_scatter_sum.1} parent=0 // pred_region
    _
  $region9: #{_scatter_sum.1} parent=0 // pred_fallthru
    _
  // Predicated region
  $region10: #{_scatter_sum.1} parent=0 // pred_check
    _
  $region11: #{_scatter_sum.1} parent=0 // pred_check_branch
    %19 = sbr.rel (0) target = $region13
  $region12: #{_scatter_sum.1} parent=0 // pred_region
    _
  $region13: #{_scatter_sum.1} parent=0 // pred_fallthru
    _
  %s20 = sld [smem:[#allocation4]]
  %s21 = smul.u32 32, %s20
  %p22 = scmp.lt.s32.totalorder %s21, 31
  %s23 = scalar_select %p22, %s21, 31
  %s24 = smul.addr %s23, 8
  %s25 = scalar_lea.vmem %s6, %s24
  %s26 = sld [smem:[#allocation4]]
  %s27 = smul.u32 32, %s26
  %p28 = scmp.lt.s32.totalorder %s27, 31
  %s29 = scalar_select %p28, %s27, 31
  %s30 = smul.addr %s29, 8
  %s31 = scalar_lea.vmem %s6, %s30
  %s32 = sld [smem:[#allocation4]]
  %s33 = smul.u32 32, %s32
  %s34 = sld [smem:[#allocation5]]
  %p35 = scmp.eq.s32.totalorder %s34, 1
  // Predicated region
  $region14: #{_scatter_sum.1} parent=0 // pred_check
    %p36 = pneg %p35
  $region15: #{_scatter_sum.1} parent=0 // pred_check_branch
    %38 = sbr.rel (%p36) target = $region17
  $region16: #{_scatter_sum.1} parent=0 // pred_region
    %39 = vst [vmem:[#allocation2] sm:$0xff] 0.0
    %40 = vst [vmem:[#allocation2 + $0x8] sm:$0xff] 0.0
    %41 = vst [vmem:[#allocation2 + $0x10] sm:$0xff] 0.0
    %42 = vst [vmem:[#allocation2 + $0x18] sm:$0xff] 0.0
    %43 = vst [vmem:[#allocation2 + $0x20] sm:$0xff] 0.0
    %44 = vst [vmem:[#allocation2 + $0x28] sm:$0xff] 0.0
    %45 = vst [vmem:[#allocation2 + $0x30] sm:$0xff] 0.0
    %46 = vst [vmem:[#allocation2 + $0x38] sm:$0xff] 0.0
    %47 = vst [vmem:[#allocation2 + $0x40] sm:$0xff] 0.0
    %48 = vst [vmem:[#allocation2 + $0x48] sm:$0xff] 0.0
    %49 = vst [vmem:[#allocation2 + $0x50] sm:$0xff] 0.0
    %50 = vst [vmem:[#allocation2 + $0x58] sm:$0xff] 0.0
    %51 = vst [vmem:[#allocation2 + $0x60] sm:$0xff] 0.0
    %52 = vst [vmem:[#allocation2 + $0x68] sm:$0xff] 0.0
    %53 = vst [vmem:[#allocation2 + $0x70] sm:$0xff] 0.0
    %54 = vst [vmem:[#allocation2 + $0x78] sm:$0xff] 0.0
    %55 = vst [vmem:[#allocation2 + $0x80] sm:$0xff] 0.0
    %56 = vst [vmem:[#allocation2 + $0x88] sm:$0xff] 0.0
    %57 = vst [vmem:[#allocation2 + $0x90] sm:$0xff] 0.0
    %58 = vst [vmem:[#allocation2 + $0x98] sm:$0xff] 0.0
    %59 = vst [vmem:[#allocation2 + $0xa0] sm:$0xff] 0.0
    %60 = vst [vmem:[#allocation2 + $0xa8] sm:$0xff] 0.0
    %61 = vst [vmem:[#allocation2 + $0xb0] sm:$0xff] 0.0
    %62 = vst [vmem:[#allocation2 + $0xb8] sm:$0xff] 0.0
    %63 = vst [vmem:[#allocation2 + $0xc0] sm:$0xff] 0.0
    %64 = vst [vmem:[#allocation2 + $0xc8] sm:$0xff] 0.0
    %65 = vst [vmem:[#allocation2 + $0xd0] sm:$0xff] 0.0
    %66 = vst [vmem:[#allocation2 + $0xd8] sm:$0xff] 0.0
    %67 = vst [vmem:[#allocation2 + $0xe0] sm:$0xff] 0.0
    %68 = vst [vmem:[#allocation2 + $0xe8] sm:$0xff] 0.0
    %69 = vst [vmem:[#allocation2 + $0xf0] sm:$0xff] 0.0
    %70 = vst [vmem:[#allocation2 + $0xf8] sm:$0xff] 0.0
  $region17: #{_scatter_sum.1} parent=0 // pred_fallthru
    _
  %v71 = vld [vmem:[%s3] sm:$0x3]
  %v72 = vld [vmem:[%s4] sm:$0x3]
  %v73 = vlaneseq
  %v74 = vshrl.u32 %v73, 7
  %v75 = vadd.s32 %v74, 8
  %v76 = vadd.s32 %v74, 16
  %v77 = vadd.s32 %v74, 24
  %v78 = vadd.s32 %v74, 32
  %v79 = vadd.s32 %v74, 40
  %v80 = vadd.s32 %v74, 48
  %v81 = vadd.s32 %v74, 56
  %v82 = vadd.s32 %v74, 64
  %v83 = vadd.s32 %v74, 72
  %v84 = vadd.s32 %v74, 80
  %v85 = vadd.s32 %v74, 88
  %v86 = vadd.s32 %v74, 96
  %v87 = vadd.s32 %v74, 104
  %v88 = vadd.s32 %v74, 112
  %v89 = vadd.s32 %v74, 120
  %v90 = vadd.s32 %v74, 128
  %v91 = vadd.s32 %v74, 136
  %v92 = vadd.s32 %v74, 144
  %v93 = vadd.s32 %v74, 152
  %v94 = vadd.s32 %v74, 160
  %v95 = vadd.s32 %v74, 168
  %v96 = vadd.s32 %v74, 176
  %v97 = vadd.s32 %v74, 184
  %v98 = vadd.s32 %v74, 192
  %v99 = vadd.s32 %v74, 200
  %v100 = vadd.s32 %v74, 208
  %v101 = vadd.s32 %v74, 216
  %v102 = vadd.s32 %v74, 224
  %v103 = vadd.s32 %v74, 232
  %v104 = vadd.s32 %v74, 240
  %v105 = vadd.s32 %v74, 248
  %v106 = vlaneseq
  %v107 = vshrl.u32 %v106, 7
  %v108 = vsub.s32 0, %v107
  %v109 = vrot.slane %v71, %v108
  %v110 = vlaneseq
  %v111 = vshrl.u32 %v110, 7
  %v112 = vsub.s32 1, %v111
  %v113 = vrot.slane %v71, %v112
  %vm114 = vcmp.eq.s32.totalorder %v109, %v74
  %vm115 = vcmp.eq.s32.totalorder %v113, %v74
  %vm116 = vcmp.eq.s32.totalorder %v109, %v75
  %vm117 = vcmp.eq.s32.totalorder %v113, %v75
  %vm118 = vcmp.eq.s32.totalorder %v109, %v76
  %vm119 = vcmp.eq.s32.totalorder %v113, %v76
  %vm120 = vcmp.eq.s32.totalorder %v109, %v77
  %vm121 = vcmp.eq.s32.totalorder %v113, %v77
  %vm122 = vcmp.eq.s32.totalorder %v109, %v78
  %vm123 = vcmp.eq.s32.totalorder %v113, %v78
  %vm124 = vcmp.eq.s32.totalorder %v109, %v79
  %vm125 = vcmp.eq.s32.totalorder %v113, %v79
  %vm126 = vcmp.eq.s32.totalorder %v109, %v80
  %vm127 = vcmp.eq.s32.totalorder %v113, %v80
  %vm128 = vcmp.eq.s32.totalorder %v109, %v81
  %vm129 = vcmp.eq.s32.totalorder %v113, %v81
  %vm130 = vcmp.eq.s32.totalorder %v109, %v82
  %vm131 = vcmp.eq.s32.totalorder %v113, %v82
  %vm132 = vcmp.eq.s32.totalorder %v109, %v83
  %vm133 = vcmp.eq.s32.totalorder %v113, %v83
  %vm134 = vcmp.eq.s32.totalorder %v109, %v84
  %vm135 = vcmp.eq.s32.totalorder %v113, %v84
  %vm136 = vcmp.eq.s32.totalorder %v109, %v85
  %vm137 = vcmp.eq.s32.totalorder %v113, %v85
  %vm138 = vcmp.eq.s32.totalorder %v109, %v86
  %vm139 = vcmp.eq.s32.totalorder %v113, %v86
  %vm140 = vcmp.eq.s32.totalorder %v109, %v87
  %vm141 = vcmp.eq.s32.totalorder %v113, %v87
  %vm142 = vcmp.eq.s32.totalorder %v109, %v88
  %vm143 = vcmp.eq.s32.totalorder %v113, %v88
  %vm144 = vcmp.eq.s32.totalorder %v109, %v89
  %vm145 = vcmp.eq.s32.totalorder %v113, %v89
  %vm146 = vcmp.eq.s32.totalorder %v109, %v90
  %vm147 = vcmp.eq.s32.totalorder %v113, %v90
  %vm148 = vcmp.eq.s32.totalorder %v109, %v91
  %vm149 = vcmp.eq.s32.totalorder %v113, %v91
  %vm150 = vcmp.eq.s32.totalorder %v109, %v92
  %vm151 = vcmp.eq.s32.totalorder %v113, %v92
  %vm152 = vcmp.eq.s32.totalorder %v109, %v93
  %vm153 = vcmp.eq.s32.totalorder %v113, %v93
  %vm154 = vcmp.eq.s32.totalorder %v109, %v94
  %vm155 = vcmp.eq.s32.totalorder %v113, %v94
  %vm156 = vcmp.eq.s32.totalorder %v109, %v95
  %vm157 = vcmp.eq.s32.totalorder %v113, %v95
  %vm158 = vcmp.eq.s32.totalorder %v109, %v96
  %vm159 = vcmp.eq.s32.totalorder %v113, %v96
  %vm160 = vcmp.eq.s32.totalorder %v109, %v97
  %vm161 = vcmp.eq.s32.totalorder %v113, %v97
  %vm162 = vcmp.eq.s32.totalorder %v109, %v98
  %vm163 = vcmp.eq.s32.totalorder %v113, %v98
  %vm164 = vcmp.eq.s32.totalorder %v109, %v99
  %vm165 = vcmp.eq.s32.totalorder %v113, %v99
  %vm166 = vcmp.eq.s32.totalorder %v109, %v100
  %vm167 = vcmp.eq.s32.totalorder %v113, %v100
  %vm168 = vcmp.eq.s32.totalorder %v109, %v101
  %vm169 = vcmp.eq.s32.totalorder %v113, %v101
  %vm170 = vcmp.eq.s32.totalorder %v109, %v102
  %vm171 = vcmp.eq.s32.totalorder %v113, %v102
  %vm172 = vcmp.eq.s32.totalorder %v109, %v103
  %vm173 = vcmp.eq.s32.totalorder %v113, %v103
  %vm174 = vcmp.eq.s32.totalorder %v109, %v104
  %vm175 = vcmp.eq.s32.totalorder %v113, %v104
  %vm176 = vcmp.eq.s32.totalorder %v109, %v105
  %vm177 = vcmp.eq.s32.totalorder %v113, %v105
  %v179 = vlaneseq
  %v180 = vshrl.u32 %v179, 7
  %v181 = vsub.s32 0, %v180
  %v182 = vrot.slane %v72, %v181
  %v183 = vlaneseq
  %v184 = vshrl.u32 %v183, 7
  %v185 = vsub.s32 1, %v184
  %v186 = vrot.slane %v72, %v185
  %v189 = vsel %vm114, %v182, 0.0
  %v190 = vsel %vm115, %v186, 0.0
  %v191 = vsel %vm116, %v182, 0.0
  %v192 = vsel %vm117, %v186, 0.0
  %v193 = vsel %vm118, %v182, 0.0
  %v194 = vsel %vm119, %v186, 0.0
  %v195 = vsel %vm120, %v182, 0.0
  %v196 = vsel %vm121, %v186, 0.0
  %v197 = vsel %vm122, %v182, 0.0
  %v198 = vsel %vm123, %v186, 0.0
  %v199 = vsel %vm124, %v182, 0.0
  %v200 = vsel %vm125, %v186, 0.0
  %v201 = vsel %vm126, %v182, 0.0
  %v202 = vsel %vm127, %v186, 0.0
  %v203 = vsel %vm128, %v182, 0.0
  %v204 = vsel %vm129, %v186, 0.0
  %v205 = vsel %vm130, %v182, 0.0
  %v206 = vsel %vm131, %v186, 0.0
  %v207 = vsel %vm132, %v182, 0.0
  %v208 = vsel %vm133, %v186, 0.0
  %v209 = vsel %vm134, %v182, 0.0
  %v210 = vsel %vm135, %v186, 0.0
  %v211 = vsel %vm136, %v182, 0.0
  %v212 = vsel %vm137, %v186, 0.0
  %v213 = vsel %vm138, %v182, 0.0
  %v214 = vsel %vm139, %v186, 0.0
  %v215 = vsel %vm140, %v182, 0.0
  %v216 = vsel %vm141, %v186, 0.0
  %v217 = vsel %vm142, %v182, 0.0
  %v218 = vsel %vm143, %v186, 0.0
  %v219 = vsel %vm144, %v182, 0.0
  %v220 = vsel %vm145, %v186, 0.0
  %v221 = vsel %vm146, %v182, 0.0
  %v222 = vsel %vm147, %v186, 0.0
  %v223 = vsel %vm148, %v182, 0.0
  %v224 = vsel %vm149, %v186, 0.0
  %v225 = vsel %vm150, %v182, 0.0
  %v226 = vsel %vm151, %v186, 0.0
  %v227 = vsel %vm152, %v182, 0.0
  %v228 = vsel %vm153, %v186, 0.0
  %v229 = vsel %vm154, %v182, 0.0
  %v230 = vsel %vm155, %v186, 0.0
  %v231 = vsel %vm156, %v182, 0.0
  %v232 = vsel %vm157, %v186, 0.0
  %v233 = vsel %vm158, %v182, 0.0
  %v234 = vsel %vm159, %v186, 0.0
  %v235 = vsel %vm160, %v182, 0.0
  %v236 = vsel %vm161, %v186, 0.0
  %v237 = vsel %vm162, %v182, 0.0
  %v238 = vsel %vm163, %v186, 0.0
  %v239 = vsel %vm164, %v182, 0.0
  %v240 = vsel %vm165, %v186, 0.0
  %v241 = vsel %vm166, %v182, 0.0
  %v242 = vsel %vm167, %v186, 0.0
  %v243 = vsel %vm168, %v182, 0.0
  %v244 = vsel %vm169, %v186, 0.0
  %v245 = vsel %vm170, %v182, 0.0
  %v246 = vsel %vm171, %v186, 0.0
  %v247 = vsel %vm172, %v182, 0.0
  %v248 = vsel %vm173, %v186, 0.0
  %v249 = vsel %vm174, %v182, 0.0
  %v250 = vsel %vm175, %v186, 0.0
  %v251 = vsel %vm176, %v182, 0.0
  %v252 = vsel %vm177, %v186, 0.0
  %v253 = vld [vmem:[%s5] sm:$0xff]
  %v254 = vld [vmem:[%s5 + $0x8] sm:$0xff]
  %v255 = vld [vmem:[%s5 + $0x10] sm:$0xff]
  %v256 = vld [vmem:[%s5 + $0x18] sm:$0xff]
  %v257 = vld [vmem:[%s5 + $0x20] sm:$0xff]
  %v258 = vld [vmem:[%s5 + $0x28] sm:$0xff]
  %v259 = vld [vmem:[%s5 + $0x30] sm:$0xff]
  %v260 = vld [vmem:[%s5 + $0x38] sm:$0xff]
  %v261 = vld [vmem:[%s5 + $0x40] sm:$0xff]
  %v262 = vld [vmem:[%s5 + $0x48] sm:$0xff]
  %v263 = vld [vmem:[%s5 + $0x50] sm:$0xff]
  %v264 = vld [vmem:[%s5 + $0x58] sm:$0xff]
  %v265 = vld [vmem:[%s5 + $0x60] sm:$0xff]
  %v266 = vld [vmem:[%s5 + $0x68] sm:$0xff]
  %v267 = vld [vmem:[%s5 + $0x70] sm:$0xff]
  %v268 = vld [vmem:[%s5 + $0x78] sm:$0xff]
  %v269 = vld [vmem:[%s5 + $0x80] sm:$0xff]
  %v270 = vld [vmem:[%s5 + $0x88] sm:$0xff]
  %v271 = vld [vmem:[%s5 + $0x90] sm:$0xff]
  %v272 = vld [vmem:[%s5 + $0x98] sm:$0xff]
  %v273 = vld [vmem:[%s5 + $0xa0] sm:$0xff]
  %v274 = vld [vmem:[%s5 + $0xa8] sm:$0xff]
  %v275 = vld [vmem:[%s5 + $0xb0] sm:$0xff]
  %v276 = vld [vmem:[%s5 + $0xb8] sm:$0xff]
  %v277 = vld [vmem:[%s5 + $0xc0] sm:$0xff]
  %v278 = vld [vmem:[%s5 + $0xc8] sm:$0xff]
  %v279 = vld [vmem:[%s5 + $0xd0] sm:$0xff]
  %v280 = vld [vmem:[%s5 + $0xd8] sm:$0xff]
  %v281 = vld [vmem:[%s5 + $0xe0] sm:$0xff]
  %v282 = vld [vmem:[%s5 + $0xe8] sm:$0xff]
  %v283 = vld [vmem:[%s5 + $0xf0] sm:$0xff]
  %v284 = vld [vmem:[%s5 + $0xf8] sm:$0xff]
  %v285 = vld [vmem:[#allocation2] sm:$0xff]
  %v286 = vld [vmem:[#allocation2 + $0x8] sm:$0xff]
  %v287 = vld [vmem:[#allocation2 + $0x10] sm:$0xff]
  %v288 = vld [vmem:[#allocation2 + $0x18] sm:$0xff]
  %v289 = vld [vmem:[#allocation2 + $0x20] sm:$0xff]
  %v290 = vld [vmem:[#allocation2 + $0x28] sm:$0xff]
  %v291 = vld [vmem:[#allocation2 + $0x30] sm:$0xff]
  %v292 = vld [vmem:[#allocation2 + $0x38] sm:$0xff]
  %v293 = vld [vmem:[#allocation2 + $0x40] sm:$0xff]
  %v294 = vld [vmem:[#allocation2 + $0x48] sm:$0xff]
  %v295 = vld [vmem:[#allocation2 + $0x50] sm:$0xff]
  %v296 = vld [vmem:[#allocation2 + $0x58] sm:$0xff]
  %v297 = vld [vmem:[#allocation2 + $0x60] sm:$0xff]
  %v298 = vld [vmem:[#allocation2 + $0x68] sm:$0xff]
  %v299 = vld [vmem:[#allocation2 + $0x70] sm:$0xff]
  %v300 = vld [vmem:[#allocation2 + $0x78] sm:$0xff]
  %v301 = vld [vmem:[#allocation2 + $0x80] sm:$0xff]
  %v302 = vld [vmem:[#allocation2 + $0x88] sm:$0xff]
  %v303 = vld [vmem:[#allocation2 + $0x90] sm:$0xff]
  %v304 = vld [vmem:[#allocation2 + $0x98] sm:$0xff]
  %v305 = vld [vmem:[#allocation2 + $0xa0] sm:$0xff]
  %v306 = vld [vmem:[#allocation2 + $0xa8] sm:$0xff]
  %v307 = vld [vmem:[#allocation2 + $0xb0] sm:$0xff]
  %v308 = vld [vmem:[#allocation2 + $0xb8] sm:$0xff]
  %v309 = vld [vmem:[#allocation2 + $0xc0] sm:$0xff]
  %v310 = vld [vmem:[#allocation2 + $0xc8] sm:$0xff]
  %v311 = vld [vmem:[#allocation2 + $0xd0] sm:$0xff]
  %v312 = vld [vmem:[#allocation2 + $0xd8] sm:$0xff]
  %v313 = vld [vmem:[#allocation2 + $0xe0] sm:$0xff]
  %v314 = vld [vmem:[#allocation2 + $0xe8] sm:$0xff]
  %v315 = vld [vmem:[#allocation2 + $0xf0] sm:$0xff]
  %v316 = vld [vmem:[#allocation2 + $0xf8] sm:$0xff]
  %317 = vmatprep.subr.mxu0 0.0
  %318 = vmatpush1.msra.mxu0 %v253
  %319 = vmatprep.subr.mxu0 0.0
  %320 = vmatpush1.msra.mxu0 %v254
  %321 = vmatprep.subr.mxu0 0.0
  %322 = vmatpush1.msra.mxu0 %v255
  %323 = vmatprep.subr.mxu0 0.0
  %324 = vmatpush1.msra.mxu0 %v256
  %325 = vmatprep.subr.mxu0 0.0
  %326 = vmatpush1.msra.mxu0 %v257
  %327 = vmatprep.subr.mxu0 0.0
  %328 = vmatpush1.msra.mxu0 %v258
  %329 = vmatprep.subr.mxu0 0.0
  %330 = vmatpush1.msra.mxu0 %v259
  %331 = vmatprep.subr.mxu0 0.0
  %332 = vmatpush1.msra.mxu0 %v260
  %333 = vmatprep.subr.mxu0 0.0
  %334 = vmatpush1.msra.mxu0 %v261
  %335 = vmatprep.subr.mxu0 0.0
  %336 = vmatpush1.msra.mxu0 %v262
  %337 = vmatprep.subr.mxu0 0.0
  %338 = vmatpush1.msra.mxu0 %v263
  %339 = vmatprep.subr.mxu0 0.0
  %340 = vmatpush1.msra.mxu0 %v264
  %341 = vmatprep.subr.mxu0 0.0
  %342 = vmatpush1.msra.mxu0 %v265
  %343 = vmatprep.subr.mxu0 0.0
  %344 = vmatpush1.msra.mxu0 %v266
  %345 = vmatprep.subr.mxu0 0.0
  %346 = vmatpush1.msra.mxu0 %v267
  %347 = vmatprep.subr.mxu0 0.0
  %348 = vmatpush1.msra.mxu0 %v268
  %349 = vmatprep.subr.mxu0 0.0
  %350 = vmatpush1.msra.mxu0 %v269
  %351 = vmatprep.subr.mxu0 0.0
  %352 = vmatpush1.msra.mxu0 %v270
  %353 = vmatprep.subr.mxu0 0.0
  %354 = vmatpush1.msra.mxu0 %v271
  %355 = vmatprep.subr.mxu0 0.0
  %356 = vmatpush1.msra.mxu0 %v272
  %357 = vmatprep.subr.mxu0 0.0
  %358 = vmatpush1.msra.mxu0 %v273
  %359 = vmatprep.subr.mxu0 0.0
  %360 = vmatpush1.msra.mxu0 %v274
  %361 = vmatprep.subr.mxu0 0.0
  %362 = vmatpush1.msra.mxu0 %v275
  %363 = vmatprep.subr.mxu0 0.0
  %364 = vmatpush1.msra.mxu0 %v276
  %365 = vmatprep.subr.mxu0 0.0
  %366 = vmatpush1.msra.mxu0 %v277
  %367 = vmatprep.subr.mxu0 0.0
  %368 = vmatpush1.msra.mxu0 %v278
  %369 = vmatprep.subr.mxu0 0.0
  %370 = vmatpush1.msra.mxu0 %v279
  %371 = vmatprep.subr.mxu0 0.0
  %372 = vmatpush1.msra.mxu0 %v280
  %373 = vmatprep.subr.mxu0 0.0
  %374 = vmatpush1.msra.mxu0 %v281
  %375 = vmatprep.subr.mxu0 0.0
  %376 = vmatpush1.msra.mxu0 %v282
  %377 = vmatprep.subr.mxu0 0.0
  %378 = vmatpush1.msra.mxu0 %v283
  %379 = vmatprep.subr.mxu0 0.0
  %380 = vmatpush1.msra.mxu0 %v284
  %381 = vmatprep.mubr.f32.mxu0 %v190
  %382 = vmatmul.mubr.f32.gmra.mrb[0].mxu0 %v189
  %v383 = vpop.f32.mrb[0].mxu0
  %v384 = vadd.f32 0.0, %v383
  %v385 = vpop.f32.mrb[0].mxu0
  %386 = vmatprep.mubr.f32.mxu0 %v192
  %387 = vmatmul.mubr.f32.gmra.mrb[0].mxu0 %v191
  %v388 = vpop.f32.mrb[0].mxu0
  %v389 = vadd.f32 0.0, %v388
  %v390 = vpop.f32.mrb[0].mxu0
  %391 = vmatprep.mubr.f32.mxu0 %v194
  %392 = vmatmul.mubr.f32.gmra.mrb[0].mxu0 %v193
  %v393 = vpop.f32.mrb[0].mxu0
  %v394 = vadd.f32 0.0, %v393
  %v395 = vpop.f32.mrb[0].mxu0
  %396 = vmatprep.mubr.f32.mxu0 %v196
  %397 = vmatmul.mubr.f32.gmra.mrb[0].mxu0 %v195
  %v398 = vpop.f32.mrb[0].mxu0
  %v399 = vadd.f32 0.0, %v398
  %v400 = vpop.f32.mrb[0].mxu0
  %401 = vmatprep.mubr.f32.mxu0 %v198
  %402 = vmatmul.mubr.f32.gmra.mrb[0].mxu0 %v197
  %v403 = vpop.f32.mrb[0].mxu0
  %v404 = vadd.f32 0.0, %v403
  %v405 = vpop.f32.mrb[0].mxu0
  %406 = vmatprep.mubr.f32.mxu0 %v200
  %407 = vmatmul.mubr.f32.gmra.mrb[0].mxu0 %v199
  %v408 = vpop.f32.mrb[0].mxu0
  %v409 = vadd.f32 0.0, %v408
  %v410 = vpop.f32.mrb[0].mxu0
  %411 = vmatprep.mubr.f32.mxu0 %v202
  %412 = vmatmul.mubr.f32.gmra.mrb[0].mxu0 %v201
  %v413 = vpop.f32.mrb[0].mxu0
  %v414 = vadd.f32 0.0, %v413
  %v415 = vpop.f32.mrb[0].mxu0
  %416 = vmatprep.mubr.f32.mxu0 %v204
  %417 = vmatmul.mubr.f32.gmra.mrb[0].mxu0 %v203
  %v418 = vpop.f32.mrb[0].mxu0
  %v419 = vadd.f32 0.0, %v418
  %v420 = vpop.f32.mrb[0].mxu0
  %421 = vmatprep.mubr.f32.mxu0 %v206
  %422 = vmatmul.mubr.f32.gmra.mrb[0].mxu0 %v205
  %v423 = vpop.f32.mrb[0].mxu0
  %v424 = vadd.f32 0.0, %v423
  %v425 = vpop.f32.mrb[0].mxu0
  %426 = vmatprep.mubr.f32.mxu0 %v208
  %427 = vmatmul.mubr.f32.gmra.mrb[0].mxu0 %v207
  %v428 = vpop.f32.mrb[0].mxu0
  %v429 = vadd.f32 0.0, %v428
  %v430 = vpop.f32.mrb[0].mxu0
  %431 = vmatprep.mubr.f32.mxu0 %v210
  %432 = vmatmul.mubr.f32.gmra.mrb[0].mxu0 %v209
  %v433 = vpop.f32.mrb[0].mxu0
  %v434 = vadd.f32 0.0, %v433
  %v435 = vpop.f32.mrb[0].mxu0
  %436 = vmatprep.mubr.f32.mxu0 %v212
  %437 = vmatmul.mubr.f32.gmra.mrb[0].mxu0 %v211
  %v438 = vpop.f32.mrb[0].mxu0
  %v439 = vadd.f32 0.0, %v438
  %v440 = vpop.f32.mrb[0].mxu0
  %441 = vmatprep.mubr.f32.mxu0 %v214
  %442 = vmatmul.mubr.f32.gmra.mrb[0].mxu0 %v213
  %v443 = vpop.f32.mrb[0].mxu0
  %v444 = vadd.f32 0.0, %v443
  %v445 = vpop.f32.mrb[0].mxu0
  %446 = vmatprep.mubr.f32.mxu0 %v216
  %447 = vmatmul.mubr.f32.gmra.mrb[0].mxu0 %v215
  %v448 = vpop.f32.mrb[0].mxu0
  %v449 = vadd.f32 0.0, %v448
  %v450 = vpop.f32.mrb[0].mxu0
  %451 = vmatprep.mubr.f32.mxu0 %v218
  %452 = vmatmul.mubr.f32.gmra.mrb[0].mxu0 %v217
  %v453 = vpop.f32.mrb[0].mxu0
  %v454 = vadd.f32 0.0, %v453
  %v455 = vpop.f32.mrb[0].mxu0
  %456 = vmatprep.mubr.f32.mxu0 %v220
  %457 = vmatmul.mubr.f32.gmra.mrb[0].mxu0 %v219
  %v458 = vpop.f32.mrb[0].mxu0
  %v459 = vadd.f32 0.0, %v458
  %v460 = vpop.f32.mrb[0].mxu0
  %461 = vmatprep.mubr.f32.mxu0 %v222
  %462 = vmatmul.mubr.f32.gmra.mrb[0].mxu0 %v221
  %v463 = vpop.f32.mrb[0].mxu0
  %v464 = vadd.f32 0.0, %v463
  %v465 = vpop.f32.mrb[0].mxu0
  %466 = vmatprep.mubr.f32.mxu0 %v224
  %467 = vmatmul.mubr.f32.gmra.mrb[0].mxu0 %v223
  %v468 = vpop.f32.mrb[0].mxu0
  %v469 = vadd.f32 0.0, %v468
  %v470 = vpop.f32.mrb[0].mxu0
  %471 = vmatprep.mubr.f32.mxu0 %v226
  %472 = vmatmul.mubr.f32.gmra.mrb[0].mxu0 %v225
  %v473 = vpop.f32.mrb[0].mxu0
  %v474 = vadd.f32 0.0, %v473
  %v475 = vpop.f32.mrb[0].mxu0
  %476 = vmatprep.mubr.f32.mxu0 %v228
  %477 = vmatmul.mubr.f32.gmra.mrb[0].mxu0 %v227
  %v478 = vpop.f32.mrb[0].mxu0
  %v479 = vadd.f32 0.0, %v478
  %v480 = vpop.f32.mrb[0].mxu0
  %481 = vmatprep.mubr.f32.mxu0 %v230
  %482 = vmatmul.mubr.f32.gmra.mrb[0].mxu0 %v229
  %v483 = vpop.f32.mrb[0].mxu0
  %v484 = vadd.f32 0.0, %v483
  %v485 = vpop.f32.mrb[0].mxu0
  %486 = vmatprep.mubr.f32.mxu0 %v232
  %487 = vmatmul.mubr.f32.gmra.mrb[0].mxu0 %v231
  %v488 = vpop.f32.mrb[0].mxu0
  %v489 = vadd.f32 0.0, %v488
  %v490 = vpop.f32.mrb[0].mxu0
  %491 = vmatprep.mubr.f32.mxu0 %v234
  %492 = vmatmul.mubr.f32.gmra.mrb[0].mxu0 %v233
  %v493 = vpop.f32.mrb[0].mxu0
  %v494 = vadd.f32 0.0, %v493
  %v495 = vpop.f32.mrb[0].mxu0
  %496 = vmatprep.mubr.f32.mxu0 %v236
  %497 = vmatmul.mubr.f32.gmra.mrb[0].mxu0 %v235
  %v498 = vpop.f32.mrb[0].mxu0
  %v499 = vadd.f32 0.0, %v498
  %v500 = vpop.f32.mrb[0].mxu0
  %501 = vmatprep.mubr.f32.mxu0 %v238
  %502 = vmatmul.mubr.f32.gmra.mrb[0].mxu0 %v237
  %v503 = vpop.f32.mrb[0].mxu0
  %v504 = vadd.f32 0.0, %v503
  %v505 = vpop.f32.mrb[0].mxu0
  %506 = vmatprep.mubr.f32.mxu0 %v240
  %507 = vmatmul.mubr.f32.gmra.mrb[0].mxu0 %v239
  %v508 = vpop.f32.mrb[0].mxu0
  %v509 = vadd.f32 0.0, %v508
  %v510 = vpop.f32.mrb[0].mxu0
  %511 = vmatprep.mubr.f32.mxu0 %v242
  %512 = vmatmul.mubr.f32.gmra.mrb[0].mxu0 %v241
  %v513 = vpop.f32.mrb[0].mxu0
  %v514 = vadd.f32 0.0, %v513
  %v515 = vpop.f32.mrb[0].mxu0
  %516 = vmatprep.mubr.f32.mxu0 %v244
  %517 = vmatmul.mubr.f32.gmra.mrb[0].mxu0 %v243
  %v518 = vpop.f32.mrb[0].mxu0
  %v519 = vadd.f32 0.0, %v518
  %v520 = vpop.f32.mrb[0].mxu0
  %521 = vmatprep.mubr.f32.mxu0 %v246
  %522 = vmatmul.mubr.f32.gmra.mrb[0].mxu0 %v245
  %v523 = vpop.f32.mrb[0].mxu0
  %v524 = vadd.f32 0.0, %v523
  %v525 = vpop.f32.mrb[0].mxu0
  %526 = vmatprep.mubr.f32.mxu0 %v248
  %527 = vmatmul.mubr.f32.gmra.mrb[0].mxu0 %v247
  %v528 = vpop.f32.mrb[0].mxu0
  %v529 = vadd.f32 0.0, %v528
  %v530 = vpop.f32.mrb[0].mxu0
  %531 = vmatprep.mubr.f32.mxu0 %v250
  %532 = vmatmul.mubr.f32.gmra.mrb[0].mxu0 %v249
  %v533 = vpop.f32.mrb[0].mxu0
  %v534 = vadd.f32 0.0, %v533
  %v535 = vpop.f32.mrb[0].mxu0
  %536 = vmatprep.mubr.f32.mxu0 %v252
  %537 = vmatmul.mubr.f32.gmra.mrb[0].mxu0 %v251
  %v538 = vpop.f32.mrb[0].mxu0
  %v539 = vadd.f32 0.0, %v538
  %v540 = vpop.f32.mrb[0].mxu0
  %541 = vdwg.mxu0
  %v542 = vadd.f32 %v285, %v384
  %v543 = vadd.f32 %v286, %v389
  %v544 = vadd.f32 %v287, %v394
  %v545 = vadd.f32 %v288, %v399
  %v546 = vadd.f32 %v289, %v404
  %v547 = vadd.f32 %v290, %v409
  %v548 = vadd.f32 %v291, %v414
  %v549 = vadd.f32 %v292, %v419
  %v550 = vadd.f32 %v293, %v424
  %v551 = vadd.f32 %v294, %v429
  %v552 = vadd.f32 %v295, %v434
  %v553 = vadd.f32 %v296, %v439
  %v554 = vadd.f32 %v297, %v444
  %v555 = vadd.f32 %v298, %v449
  %v556 = vadd.f32 %v299, %v454
  %v557 = vadd.f32 %v300, %v459
  %v558 = vadd.f32 %v301, %v464
  %v559 = vadd.f32 %v302, %v469
  %v560 = vadd.f32 %v303, %v474
  %v561 = vadd.f32 %v304, %v479
  %v562 = vadd.f32 %v305, %v484
  %v563 = vadd.f32 %v306, %v489
  %v564 = vadd.f32 %v307, %v494
  %v565 = vadd.f32 %v308, %v499
  %v566 = vadd.f32 %v309, %v504
  %v567 = vadd.f32 %v310, %v509
  %v568 = vadd.f32 %v311, %v514
  %v569 = vadd.f32 %v312, %v519
  %v570 = vadd.f32 %v313, %v524
  %v571 = vadd.f32 %v314, %v529
  %v572 = vadd.f32 %v315, %v534
  %v573 = vadd.f32 %v316, %v539
  %574 = vst [vmem:[#allocation2] sm:$0xff] %v542
  %575 = vst [vmem:[#allocation2 + $0x8] sm:$0xff] %v543
  %576 = vst [vmem:[#allocation2 + $0x10] sm:$0xff] %v544
  %577 = vst [vmem:[#allocation2 + $0x18] sm:$0xff] %v545
  %578 = vst [vmem:[#allocation2 + $0x20] sm:$0xff] %v546
  %579 = vst [vmem:[#allocation2 + $0x28] sm:$0xff] %v547
  %580 = vst [vmem:[#allocation2 + $0x30] sm:$0xff] %v548
  %581 = vst [vmem:[#allocation2 + $0x38] sm:$0xff] %v549
  %582 = vst [vmem:[#allocation2 + $0x40] sm:$0xff] %v550
  %583 = vst [vmem:[#allocation2 + $0x48] sm:$0xff] %v551
  %584 = vst [vmem:[#allocation2 + $0x50] sm:$0xff] %v552
  %585 = vst [vmem:[#allocation2 + $0x58] sm:$0xff] %v553
  %586 = vst [vmem:[#allocation2 + $0x60] sm:$0xff] %v554
  %587 = vst [vmem:[#allocation2 + $0x68] sm:$0xff] %v555
  %588 = vst [vmem:[#allocation2 + $0x70] sm:$0xff] %v556
  %589 = vst [vmem:[#allocation2 + $0x78] sm:$0xff] %v557
  %590 = vst [vmem:[#allocation2 + $0x80] sm:$0xff] %v558
  %591 = vst [vmem:[#allocation2 + $0x88] sm:$0xff] %v559
  %592 = vst [vmem:[#allocation2 + $0x90] sm:$0xff] %v560
  %593 = vst [vmem:[#allocation2 + $0x98] sm:$0xff] %v561
  %594 = vst [vmem:[#allocation2 + $0xa0] sm:$0xff] %v562
  %595 = vst [vmem:[#allocation2 + $0xa8] sm:$0xff] %v563
  %596 = vst [vmem:[#allocation2 + $0xb0] sm:$0xff] %v564
  %597 = vst [vmem:[#allocation2 + $0xb8] sm:$0xff] %v565
  %598 = vst [vmem:[#allocation2 + $0xc0] sm:$0xff] %v566
  %599 = vst [vmem:[#allocation2 + $0xc8] sm:$0xff] %v567
  %600 = vst [vmem:[#allocation2 + $0xd0] sm:$0xff] %v568
  %601 = vst [vmem:[#allocation2 + $0xd8] sm:$0xff] %v569
  %602 = vst [vmem:[#allocation2 + $0xe0] sm:$0xff] %v570
  %603 = vst [vmem:[#allocation2 + $0xe8] sm:$0xff] %v571
  %604 = vst [vmem:[#allocation2 + $0xf0] sm:$0xff] %v572
  %605 = vst [vmem:[#allocation2 + $0xf8] sm:$0xff] %v573
  %s606 = sld [smem:[#allocation6]]
  %p607 = scmp.eq.s32.totalorder %s606, 1
  // Predicated region
  $region18: #{_scatter_sum.1} parent=0 // pred_check
    %p608 = pneg %p607
  $region19: #{_scatter_sum.1} parent=0 // pred_check_branch
    %610 = sbr.rel (%p608) target = $region21
  $region20: #{_scatter_sum.1} parent=0 // pred_region
    %v611 = vld [vmem:[#allocation2] sm:$0xff]
    %v612 = vld [vmem:[#allocation2 + $0x8] sm:$0xff]
    %v613 = vld [vmem:[#allocation2 + $0x10] sm:$0xff]
    %v614 = vld [vmem:[#allocation2 + $0x18] sm:$0xff]
    %v615 = vld [vmem:[#allocation2 + $0x20] sm:$0xff]
    %v616 = vld [vmem:[#allocation2 + $0x28] sm:$0xff]
    %v617 = vld [vmem:[#allocation2 + $0x30] sm:$0xff]
    %v618 = vld [vmem:[#allocation2 + $0x38] sm:$0xff]
    %v619 = vld [vmem:[#allocation2 + $0x40] sm:$0xff]
    %v620 = vld [vmem:[#allocation2 + $0x48] sm:$0xff]
    %v621 = vld [vmem:[#allocation2 + $0x50] sm:$0xff]
    %v622 = vld [vmem:[#allocation2 + $0x58] sm:$0xff]
    %v623 = vld [vmem:[#allocation2 + $0x60] sm:$0xff]
    %v624 = vld [vmem:[#allocation2 + $0x68] sm:$0xff]
    %v625 = vld [vmem:[#allocation2 + $0x70] sm:$0xff]
    %v626 = vld [vmem:[#allocation2 + $0x78] sm:$0xff]
    %v627 = vld [vmem:[#allocation2 + $0x80] sm:$0xff]
    %v628 = vld [vmem:[#allocation2 + $0x88] sm:$0xff]
    %v629 = vld [vmem:[#allocation2 + $0x90] sm:$0xff]
    %v630 = vld [vmem:[#allocation2 + $0x98] sm:$0xff]
    %v631 = vld [vmem:[#allocation2 + $0xa0] sm:$0xff]
    %v632 = vld [vmem:[#allocation2 + $0xa8] sm:$0xff]
    %v633 = vld [vmem:[#allocation2 + $0xb0] sm:$0xff]
    %v634 = vld [vmem:[#allocation2 + $0xb8] sm:$0xff]
    %v635 = vld [vmem:[#allocation2 + $0xc0] sm:$0xff]
    %v636 = vld [vmem:[#allocation2 + $0xc8] sm:$0xff]
    %v637 = vld [vmem:[#allocation2 + $0xd0] sm:$0xff]
    %v638 = vld [vmem:[#allocation2 + $0xd8] sm:$0xff]
    %v639 = vld [vmem:[#allocation2 + $0xe0] sm:$0xff]
    %v640 = vld [vmem:[#allocation2 + $0xe8] sm:$0xff]
    %v641 = vld [vmem:[#allocation2 + $0xf0] sm:$0xff]
    %v642 = vld [vmem:[#allocation2 + $0xf8] sm:$0xff]
    %643 = vst [vmem:[%s31] sm:$0xff] %v611
    %644 = vst [vmem:[%s31 + $0x8] sm:$0xff] %v612
    %645 = vst [vmem:[%s31 + $0x10] sm:$0xff] %v613
    %646 = vst [vmem:[%s31 + $0x18] sm:$0xff] %v614
    %647 = vst [vmem:[%s31 + $0x20] sm:$0xff] %v615
    %648 = vst [vmem:[%s31 + $0x28] sm:$0xff] %v616
    %649 = vst [vmem:[%s31 + $0x30] sm:$0xff] %v617
    %650 = vst [vmem:[%s31 + $0x38] sm:$0xff] %v618
    %651 = vst [vmem:[%s31 + $0x40] sm:$0xff] %v619
    %652 = vst [vmem:[%s31 + $0x48] sm:$0xff] %v620
    %653 = vst [vmem:[%s31 + $0x50] sm:$0xff] %v621
    %654 = vst [vmem:[%s31 + $0x58] sm:$0xff] %v622
    %655 = vst [vmem:[%s31 + $0x60] sm:$0xff] %v623
    %656 = vst [vmem:[%s31 + $0x68] sm:$0xff] %v624
    %657 = vst [vmem:[%s31 + $0x70] sm:$0xff] %v625
    %658 = vst [vmem:[%s31 + $0x78] sm:$0xff] %v626
    %659 = vst [vmem:[%s31 + $0x80] sm:$0xff] %v627
    %660 = vst [vmem:[%s31 + $0x88] sm:$0xff] %v628
    %661 = vst [vmem:[%s31 + $0x90] sm:$0xff] %v629
    %662 = vst [vmem:[%s31 + $0x98] sm:$0xff] %v630
    %663 = vst [vmem:[%s31 + $0xa0] sm:$0xff] %v631
    %664 = vst [vmem:[%s31 + $0xa8] sm:$0xff] %v632
    %665 = vst [vmem:[%s31 + $0xb0] sm:$0xff] %v633
    %666 = vst [vmem:[%s31 + $0xb8] sm:$0xff] %v634
    %667 = vst [vmem:[%s31 + $0xc0] sm:$0xff] %v635
    %668 = vst [vmem:[%s31 + $0xc8] sm:$0xff] %v636
    %669 = vst [vmem:[%s31 + $0xd0] sm:$0xff] %v637
    %670 = vst [vmem:[%s31 + $0xd8] sm:$0xff] %v638
    %671 = vst [vmem:[%s31 + $0xe0] sm:$0xff] %v639
    %672 = vst [vmem:[%s31 + $0xe8] sm:$0xff] %v640
    %673 = vst [vmem:[%s31 + $0xf0] sm:$0xff] %v641
    %674 = vst [vmem:[%s31 + $0xf8] sm:$0xff] %v642
  $region21: #{_scatter_sum.1} parent=0 // pred_fallthru
    _
  %s675 = sld [smem:[#allocation4]]
  %s676 = smul.u32 32, %s675
  %p677 = scmp.lt.s32.totalorder %s676, 31
  %s678 = scalar_select %p677, %s676, 31
  %s679 = smul.addr %s678, 8
  %s680 = scalar_lea.vmem %s6, %s679
  // Predicated region
  $region22: #{_scatter_sum.1} parent=0 // pred_check
    _
  $region23: #{_scatter_sum.1} parent=0 // pred_check_branch
    %682 = sbr.rel (0) target = $region25
  $region24: #{_scatter_sum.1} parent=0 // pred_region
    %s683 = sld [smem:[#allocation4]]
    %s684 = smul.u32 32, %s683
  $region25: #{_scatter_sum.1} parent=0 // pred_fallthru
    _
  // Predicated region
  $region26: #{_scatter_sum.1} parent=0 // pred_check
    _
  $region27: #{_scatter_sum.1} parent=0 // pred_check_branch
    %686 = sbr.rel (0) target = $region29
  $region28: #{_scatter_sum.1} parent=0 // pred_region
    %s687 = sld [smem:[#allocation4]]
    %s688 = smul.u32 32, %s687
    %p689 = scmp.lt.s32.totalorder %s688, 31
    %s690 = scalar_select %p689, %s688, 31
    %s691 = smul.addr %s690, 8
    %s692 = scalar_lea.vmem %s6, %s691
  $region29: #{_scatter_sum.1} parent=0 // pred_fallthru
    _

</llo_original>
